<compile_context>
chip_gen: v7x
topology: tpu7x:2x2x1
jax: 0.10.0
libtpu: 0.0.40
codegen_flags: <defaults>
</compile_context>

<pallas_src>
import functools

import jax
import jax.numpy as jnp
from jax.experimental import pallas as pl
from jax.experimental.pallas import tpu as pltpu


_DEFAULT_VMEM_BYTES = 64 << 20      # conservative fallback (v7x per-TC VMEM)
_TARGET_BLOCK_BYTES = 4 << 20       # ~1-4 MiB per block -> >=85% HBM roofline
_SLACK_BYTES = 2 << 20              # headroom for Mosaic internal scratch


def _vmem_capacity_bytes():
    """Physical VMEM per TensorCore (64 MiB v7x, 128 MiB v5e/v6e)."""
    try:
        cap = getattr(pltpu.get_tpu_info(), "vmem_capacity_bytes", None)
        if cap:
            return int(cap)
    except Exception:
        pass
    return _DEFAULT_VMEM_BYTES


def _pick_block(desired, full, align):
    """Largest legal block size <= desired for a dim of size `full`
    (either `full` itself or a positive multiple of `align`)."""
    desired = max(1, int(desired))
    if desired >= full or full <= align:
        return full
    return max(align, (desired // align) * align)


# ---------------------------------------------------------------------------
# kernels
# ---------------------------------------------------------------------------
def _conv1x1_lane_kernel(x_ref, w_ref, b_ref, o_ref, *, use_mxu):
    """Lane-dense path.  x_ref: (1, C, tile_s); w_ref: (C, C) = W + I (compute
    dtype); b_ref: (C, 1) f32; o_ref: (1, C, tile_s)."""
    x = x_ref[0]                                   # (C, tile_s), spatial on lanes
    w = w_ref[...]
    b = b_ref[...].astype(jnp.float32)             # (C, 1), broadcasts over lanes

    if use_mxu:
        # bf16 inputs stay bf16 (MXU-native); accumulate in f32 on the MXU.
        xc = x if x.dtype == w.dtype else x.astype(w.dtype)
        y = jnp.dot(w, xc, preferred_element_type=jnp.float32) + b
    else:
        # Tiny C with a ragged spatial dim: C broadcast FMAs on the VPU.
        xf = x.astype(jnp.float32)
        wf = w.astype(jnp.float32)
        y = jnp.broadcast_to(b, xf.shape)
        for ci in range(xf.shape[0]):
            y = y + wf[:, ci:ci + 1] * xf[ci:ci + 1, :]

    o_ref[0] = jnp.maximum(y, 0.0).astype(o_ref.dtype)


def _conv1x1_packed_kernel(x_ref, w_ref, b_ref, o_ref, *, C):
    """Sublane-packed tiny-C path.  x_ref/o_ref: (1, C, R, 128) VMEM;
    w_ref: (C, C) f32 in SMEM (= W + I); b_ref: (C,) f32 in SMEM."""
    for co in range(C):
        acc = x_ref[0, 0].astype(jnp.float32) * w_ref[co, 0] + b_ref[co]
        for ci in range(1, C):
            acc = acc + x_ref[0, ci].astype(jnp.float32) * w_ref[co, ci]
        o_ref[0, co, :, :] = jnp.maximum(acc, 0.0).astype(o_ref.dtype)


# ---------------------------------------------------------------------------
# wrapper
# ---------------------------------------------------------------------------
def basis_conv2d_forward(x_nchw, weight, bias):
    """relu(x + conv1x1(x)).  x: (N, C, H, W); weight: (C, C) = conv.weight[:, :, 0, 0];
    bias: (C,).  Dropout2d in eval mode (identity)."""
    N, C, H, W = x_nchw.shape
    S = H * W
    itemsize = jnp.dtype(x_nchw.dtype).itemsize
    is_bf16 = x_nchw.dtype == jnp.bfloat16

    vmem_cap = _vmem_capacity_bytes()
    budget = int(vmem_cap * 0.6)                   # tiles + resident weights

    # Residual fold: relu(x + W x + b) == relu((W + I) x + b).
    w_eff_f32 = weight.astype(jnp.float32) + jnp.eye(C, dtype=jnp.float32)
    b_f32 = bias.astype(jnp.float32)

    flops = 2 * N * S * C * C
    small_c = C <= (16 if is_bf16 else 8)          # VPU channel mix only for tiny C

    if small_c and S % 128 == 0:
        # ---- sublane-packed tiny-C path: blocks (1, C, R, 128) -------------
        s128 = S // 128
        row_bytes = C * 128 * itemsize
        r_desired = min(_TARGET_BLOCK_BYTES // row_bytes,
                        max(8, (budget - _SLACK_BYTES) // (4 * row_bytes)))
        r = _pick_block(r_desired, s128, 8)

        block_bytes = C * r * 128 * itemsize
        vmem_plan = 4 * block_bytes + _SLACK_BYTES           # 2 in + 2 out buffers
        vmem_limit = min(max(vmem_plan, 8 << 20), int(vmem_cap * 0.75))

        out = pl.pallas_call(
            functools.partial(_conv1x1_packed_kernel, C=C),
            out_shape=jax.ShapeDtypeStruct((N, C, s128, 128), x_nchw.dtype),
            grid_spec=pltpu.PrefetchScalarGridSpec(
                num_scalar_prefetch=0,
                grid=(N, pl.cdiv(s128, r)),
                in_specs=[
                    pl.BlockSpec((1, C, r, 128), lambda n, i: (n, 0, i, 0)),
                    pl.BlockSpec(memory_space=pltpu.MemorySpace.SMEM),  # W + I
                    pl.BlockSpec(memory_space=pltpu.MemorySpace.SMEM),  # bias
                ],
                out_specs=pl.BlockSpec((1, C, r, 128), lambda n, i: (n, 0, i, 0)),
            ),
            compiler_params=pltpu.CompilerParams(
                dimension_semantics=("parallel", "parallel"),
                vmem_limit_bytes=vmem_limit,
            ),
            cost_estimate=pl.CostEstimate(
                flops=flops, transcendentals=0,
                bytes_accessed=2 * N * C * S * itemsize + (C * C + C) * 4),
        )(x_nchw.reshape(N, C, s128, 128), w_eff_f32, b_f32)
        return out.reshape(N, C, H, W)

    # ---- general lane-dense path: blocks (1, C, tile_s), MXU channel mix ----
    use_mxu = not small_c
    compute_dtype = jnp.bfloat16 if (use_mxu and is_bf16) else jnp.float32
    w_eff = w_eff_f32.astype(compute_dtype)
    w_bytes = C * C * jnp.dtype(compute_dtype).itemsize

    # TODO(synk): if C ever grows to ~2k+ (resident (C, C) weight approaching the
    # VMEM budget), add a ci-reduction grid axis (K-tiled weight + f32 VMEM
    # accumulator with pl.when init/finalize).  input_dim for this module is tiny.

    align = 256 if use_mxu else 128     # 256-wide MXU result path on v6e/v7x
    s_desired = min(_TARGET_BLOCK_BYTES // (C * itemsize),
                    max(align, (budget - 2 * w_bytes - _SLACK_BYTES) // (4 * C * itemsize)))
    tile_s = _pick_block(s_desired, S, align)

    block_bytes = C * tile_s * itemsize
    vmem_plan = 4 * block_bytes + 2 * (w_bytes + C * 4) + _SLACK_BYTES
    vmem_limit = min(max(vmem_plan, 8 << 20), int(vmem_cap * 0.75))

    out = pl.pallas_call(
        functools.partial(_conv1x1_lane_kernel, use_mxu=use_mxu),
        out_shape=jax.ShapeDtypeStruct((N, C, S), x_nchw.dtype),
        grid_spec=pltpu.PrefetchScalarGridSpec(
            num_scalar_prefetch=0,
            grid=(N, pl.cdiv(S, tile_s)),
            in_specs=[
                pl.BlockSpec((1, C, tile_s), lambda n, s: (n, 0, s)),   # x tile
                pl.BlockSpec((C, C), lambda n, s: (0, 0)),              # W + I
                pl.BlockSpec((C, 1), lambda n, s: (0, 0)),              # bias
            ],
            out_specs=pl.BlockSpec((1, C, tile_s), lambda n, s: (n, 0, s)),
        ),
        compiler_params=pltpu.CompilerParams(
            dimension_semantics=("parallel", "parallel"),
            vmem_limit_bytes=vmem_limit,
        ),
        cost_estimate=pl.CostEstimate(
            flops=flops, transcendentals=0,
            bytes_accessed=2 * N * C * S * itemsize + w_bytes + C * 4),
    )(x_nchw.reshape(N, C, S), w_eff, b_f32.reshape(C, 1))
    return out.reshape(N, C, H, W)


# ---------------------------------------------------------------------------
# reference + demo
# ---------------------------------------------------------------------------
def _reference(x_nchw, weight, bias):
    y = jnp.einsum("nchw,oc->nohw", x_nchw, weight) + bias[None, :, None, None]
    return jnp.maximum(x_nchw + y, 0.0)


def _make_inputs(key, N, C, H, W):
    # Values chosen exactly representable in bf16 (x) / with <=6 mantissa bits
    # (weight, and weight + 1) so the 1e-5 check stays tight no matter how many
    # bf16 passes any matmul path (kernel MXU or XLA reference) uses.
    k_x, k_w, k_b = jax.random.split(key, 3)
    x = jax.random.normal(k_x, (N, C, H, W), dtype=jnp.float32)
    x = x.astype(jnp.bfloat16).astype(jnp.float32)
    weight = jax.random.randint(k_w, (C, C), -32, 33).astype(jnp.float32) / 64.0
    bias = jax.random.uniform(k_b, (C,), minval=-0.5, maxval=0.5, dtype=jnp.float32)
    return x, weight, bias


if __name__ == "__main__":
    key = jax.random.PRNGKey(0)

    # Primary shape implied by the module: basis_conv2d(input_dim=4) on (2, 4, 16, 16).
    # Extra small cases exercise the other code paths.
    cases = [
        (2, 4, 16, 16),   # tiny C, S % 128 == 0  -> sublane-packed VPU path
        (2, 4, 10, 10),   # tiny C, ragged S      -> lane-dense VPU path
        (2, 32, 9, 9),    # C above VPU threshold -> lane-dense MXU path
    ]
    for idx, (N, C, H, W) in enumerate(cases):
        x, weight, bias = _make_inputs(jax.random.fold_in(key, idx), N, C, H, W)
        out = jax.block_until_ready(basis_conv2d_forward(x, weight, bias))
        ref = _reference(x, weight, bias)
        assert out.shape == (N, C, H, W)
        assert jnp.allclose(out, ref, atol=1e-5, rtol=1e-5), f"mismatch at {(N, C, H, W)}"

    # TODO(synk): Dropout2d(0.1) training-mode stochastic channel masking is not
    # modeled; eval-mode (identity) forward semantics are implemented.
    print("KERNEL_OK")
</pallas_src>

<mosaic_0001>
module attributes {stable_mosaic.version = 11 : i64} {
  func.func @_conv1x1_packed_kernel(%arg0: i32, %arg1: i32, %arg2: memref<1x4x2x128xf32, #tpu.memory_space<vmem>>, %arg3: memref<4x4xf32, #tpu.memory_space<smem>>, %arg4: memref<4xf32, #tpu.memory_space<smem>>, %arg5: memref<1x4x2x128xf32, #tpu.memory_space<vmem>>) attributes {dimension_semantics = [#tpu.dimension_semantics<parallel>, #tpu.dimension_semantics<parallel>], iteration_bounds = array<i64: 2, 1>, scalar_prefetch = 0 : i64, scratch_operands = 0 : i64, tpu.core_type = #tpu.core_type<tc>, window_params = [{transform_indices = @transform_0, window_bounds = array<i64: 1, 4, 2, 128>}, {transform_indices = @transform_1, window_bounds = array<i64: 4, 4>}, {transform_indices = @transform_2, window_bounds = array<i64: 4>}, {transform_indices = @transform_3, window_bounds = array<i64: 1, 4, 2, 128>}]} {
    %c0 = arith.constant 0 : index
    %c0_0 = arith.constant 0 : index
    %c0_1 = arith.constant 0 : index
    %c0_2 = arith.constant 0 : index
    %0 = vector.load %arg2[%c0, %c0_0, %c0_1, %c0_2] : memref<1x4x2x128xf32, #tpu.memory_space<vmem>>, vector<1x1x2x128xf32>
    %1 = vector.shape_cast %0 : vector<1x1x2x128xf32> to vector<2x128xf32>
    %c0_3 = arith.constant 0 : index
    %c0_4 = arith.constant 0 : index
    %2 = memref.load %arg3[%c0_3, %c0_4] : memref<4x4xf32, #tpu.memory_space<smem>>
    %3 = vector.broadcast %2 : f32 to vector<2x128xf32>
    %4 = arith.mulf %1, %3 : vector<2x128xf32>
    %c0_5 = arith.constant 0 : index
    %5 = memref.load %arg4[%c0_5] : memref<4xf32, #tpu.memory_space<smem>>
    %6 = vector.broadcast %5 : f32 to vector<2x128xf32>
    %7 = arith.addf %4, %6 : vector<2x128xf32>
    %c0_6 = arith.constant 0 : index
    %c1 = arith.constant 1 : index
    %c0_7 = arith.constant 0 : index
    %c0_8 = arith.constant 0 : index
    %8 = vector.load %arg2[%c0_6, %c1, %c0_7, %c0_8] : memref<1x4x2x128xf32, #tpu.memory_space<vmem>>, vector<1x1x2x128xf32>
    %9 = vector.shape_cast %8 : vector<1x1x2x128xf32> to vector<2x128xf32>
    %c0_9 = arith.constant 0 : index
    %c1_10 = arith.constant 1 : index
    %10 = memref.load %arg3[%c0_9, %c1_10] : memref<4x4xf32, #tpu.memory_space<smem>>
    %11 = vector.broadcast %10 : f32 to vector<2x128xf32>
    %12 = arith.mulf %9, %11 : vector<2x128xf32>
    %13 = arith.addf %7, %12 : vector<2x128xf32>
    %c0_11 = arith.constant 0 : index
    %c2 = arith.constant 2 : index
    %c0_12 = arith.constant 0 : index
    %c0_13 = arith.constant 0 : index
    %14 = vector.load %arg2[%c0_11, %c2, %c0_12, %c0_13] : memref<1x4x2x128xf32, #tpu.memory_space<vmem>>, vector<1x1x2x128xf32>
    %15 = vector.shape_cast %14 : vector<1x1x2x128xf32> to vector<2x128xf32>
    %c0_14 = arith.constant 0 : index
    %c2_15 = arith.constant 2 : index
    %16 = memref.load %arg3[%c0_14, %c2_15] : memref<4x4xf32, #tpu.memory_space<smem>>
    %17 = vector.broadcast %16 : f32 to vector<2x128xf32>
    %18 = arith.mulf %15, %17 : vector<2x128xf32>
    %19 = arith.addf %13, %18 : vector<2x128xf32>
    %c0_16 = arith.constant 0 : index
    %c3 = arith.constant 3 : index
    %c0_17 = arith.constant 0 : index
    %c0_18 = arith.constant 0 : index
    %20 = vector.load %arg2[%c0_16, %c3, %c0_17, %c0_18] : memref<1x4x2x128xf32, #tpu.memory_space<vmem>>, vector<1x1x2x128xf32>
    %21 = vector.shape_cast %20 : vector<1x1x2x128xf32> to vector<2x128xf32>
    %c0_19 = arith.constant 0 : index
    %c3_20 = arith.constant 3 : index
    %22 = memref.load %arg3[%c0_19, %c3_20] : memref<4x4xf32, #tpu.memory_space<smem>>
    %23 = vector.broadcast %22 : f32 to vector<2x128xf32>
    %24 = arith.mulf %21, %23 : vector<2x128xf32>
    %25 = arith.addf %19, %24 : vector<2x128xf32>
    %cst = arith.constant 0.000000e+00 : f32
    %26 = vector.broadcast %cst : f32 to vector<2x128xf32>
    %27 = arith.maximumf %25, %26 : vector<2x128xf32>
    %c0_21 = arith.constant 0 : index
    %c0_22 = arith.constant 0 : index
    %c0_23 = arith.constant 0 : index
    %c0_24 = arith.constant 0 : index
    %28 = vector.load %arg5[%c0_21, %c0_22, %c0_23, %c0_24] : memref<1x4x2x128xf32, #tpu.memory_space<vmem>>, vector<1x1x2x128xf32>
    %29 = vector.shape_cast %28 : vector<1x1x2x128xf32> to vector<2x128xf32>
    %30 = vector.shape_cast %27 : vector<2x128xf32> to vector<1x1x2x128xf32>
    tpu.vector_store %arg5[%c0_21, %c0_22, %c0_23, %c0_24], %30 {strides = array<i32>} : memref<1x4x2x128xf32, #tpu.memory_space<vmem>>, vector<1x1x2x128xf32>,
    %c0_25 = arith.constant 0 : index
    %c0_26 = arith.constant 0 : index
    %c0_27 = arith.constant 0 : index
    %c0_28 = arith.constant 0 : index
    %31 = vector.load %arg2[%c0_25, %c0_26, %c0_27, %c0_28] : memref<1x4x2x128xf32, #tpu.memory_space<vmem>>, vector<1x1x2x128xf32>
    %32 = vector.shape_cast %31 : vector<1x1x2x128xf32> to vector<2x128xf32>
    %c1_29 = arith.constant 1 : index
    %c0_30 = arith.constant 0 : index
    %33 = memref.load %arg3[%c1_29, %c0_30] : memref<4x4xf32, #tpu.memory_space<smem>>
    %34 = vector.broadcast %33 : f32 to vector<2x128xf32>
    %35 = arith.mulf %32, %34 : vector<2x128xf32>
    %c1_31 = arith.constant 1 : index
    %36 = memref.load %arg4[%c1_31] : memref<4xf32, #tpu.memory_space<smem>>
    %37 = vector.broadcast %36 : f32 to vector<2x128xf32>
    %38 = arith.addf %35, %37 : vector<2x128xf32>
    %c0_32 = arith.constant 0 : index
    %c1_33 = arith.constant 1 : index
    %c0_34 = arith.constant 0 : index
    %c0_35 = arith.constant 0 : index
    %39 = vector.load %arg2[%c0_32, %c1_33, %c0_34, %c0_35] : memref<1x4x2x128xf32, #tpu.memory_space<vmem>>, vector<1x1x2x128xf32>
    %40 = vector.shape_cast %39 : vector<1x1x2x128xf32> to vector<2x128xf32>
    %c1_36 = arith.constant 1 : index
    %c1_37 = arith.constant 1 : index
    %41 = memref.load %arg3[%c1_36, %c1_37] : memref<4x4xf32, #tpu.memory_space<smem>>
    %42 = vector.broadcast %41 : f32 to vector<2x128xf32>
    %43 = arith.mulf %40, %42 : vector<2x128xf32>
    %44 = arith.addf %38, %43 : vector<2x128xf32>
    %c0_38 = arith.constant 0 : index
    %c2_39 = arith.constant 2 : index
    %c0_40 = arith.constant 0 : index
    %c0_41 = arith.constant 0 : index
    %45 = vector.load %arg2[%c0_38, %c2_39, %c0_40, %c0_41] : memref<1x4x2x128xf32, #tpu.memory_space<vmem>>, vector<1x1x2x128xf32>
    %46 = vector.shape_cast %45 : vector<1x1x2x128xf32> to vector<2x128xf32>
    %c1_42 = arith.constant 1 : index
    %c2_43 = arith.constant 2 : index
    %47 = memref.load %arg3[%c1_42, %c2_43] : memref<4x4xf32, #tpu.memory_space<smem>>
    %48 = vector.broadcast %47 : f32 to vector<2x128xf32>
    %49 = arith.mulf %46, %48 : vector<2x128xf32>
    %50 = arith.addf %44, %49 : vector<2x128xf32>
    %c0_44 = arith.constant 0 : index
    %c3_45 = arith.constant 3 : index
    %c0_46 = arith.constant 0 : index
    %c0_47 = arith.constant 0 : index
    %51 = vector.load %arg2[%c0_44, %c3_45, %c0_46, %c0_47] : memref<1x4x2x128xf32, #tpu.memory_space<vmem>>, vector<1x1x2x128xf32>
    %52 = vector.shape_cast %51 : vector<1x1x2x128xf32> to vector<2x128xf32>
    %c1_48 = arith.constant 1 : index
    %c3_49 = arith.constant 3 : index
    %53 = memref.load %arg3[%c1_48, %c3_49] : memref<4x4xf32, #tpu.memory_space<smem>>
    %54 = vector.broadcast %53 : f32 to vector<2x128xf32>
    %55 = arith.mulf %52, %54 : vector<2x128xf32>
    %56 = arith.addf %50, %55 : vector<2x128xf32>
    %cst_50 = arith.constant 0.000000e+00 : f32
    %57 = vector.broadcast %cst_50 : f32 to vector<2x128xf32>
    %58 = arith.maximumf %56, %57 : vector<2x128xf32>
    %c0_51 = arith.constant 0 : index
    %c1_52 = arith.constant 1 : index
    %c0_53 = arith.constant 0 : index
    %c0_54 = arith.constant 0 : index
    %59 = vector.load %arg5[%c0_51, %c1_52, %c0_53, %c0_54] : memref<1x4x2x128xf32, #tpu.memory_space<vmem>>, vector<1x1x2x128xf32>
    %60 = vector.shape_cast %59 : vector<1x1x2x128xf32> to vector<2x128xf32>
    %61 = vector.shape_cast %58 : vector<2x128xf32> to vector<1x1x2x128xf32>
    tpu.vector_store %arg5[%c0_51, %c1_52, %c0_53, %c0_54], %61 {strides = array<i32>} : memref<1x4x2x128xf32, #tpu.memory_space<vmem>>, vector<1x1x2x128xf32>,
    %c0_55 = arith.constant 0 : index
    %c0_56 = arith.constant 0 : index
    %c0_57 = arith.constant 0 : index
    %c0_58 = arith.constant 0 : index
    %62 = vector.load %arg2[%c0_55, %c0_56, %c0_57, %c0_58] : memref<1x4x2x128xf32, #tpu.memory_space<vmem>>, vector<1x1x2x128xf32>
    %63 = vector.shape_cast %62 : vector<1x1x2x128xf32> to vector<2x128xf32>
    %c2_59 = arith.constant 2 : index
    %c0_60 = arith.constant 0 : index
    %64 = memref.load %arg3[%c2_59, %c0_60] : memref<4x4xf32, #tpu.memory_space<smem>>
    %65 = vector.broadcast %64 : f32 to vector<2x128xf32>
    %66 = arith.mulf %63, %65 : vector<2x128xf32>
    %c2_61 = arith.constant 2 : index
    %67 = memref.load %arg4[%c2_61] : memref<4xf32, #tpu.memory_space<smem>>
    %68 = vector.broadcast %67 : f32 to vector<2x128xf32>
    %69 = arith.addf %66, %68 : vector<2x128xf32>
    %c0_62 = arith.constant 0 : index
    %c1_63 = arith.constant 1 : index
    %c0_64 = arith.constant 0 : index
    %c0_65 = arith.constant 0 : index
    %70 = vector.load %arg2[%c0_62, %c1_63, %c0_64, %c0_65] : memref<1x4x2x128xf32, #tpu.memory_space<vmem>>, vector<1x1x2x128xf32>
    %71 = vector.shape_cast %70 : vector<1x1x2x128xf32> to vector<2x128xf32>
    %c2_66 = arith.constant 2 : index
    %c1_67 = arith.constant 1 : index
    %72 = memref.load %arg3[%c2_66, %c1_67] : memref<4x4xf32, #tpu.memory_space<smem>>
    %73 = vector.broadcast %72 : f32 to vector<2x128xf32>
    %74 = arith.mulf %71, %73 : vector<2x128xf32>
    %75 = arith.addf %69, %74 : vector<2x128xf32>
    %c0_68 = arith.constant 0 : index
    %c2_69 = arith.constant 2 : index
    %c0_70 = arith.constant 0 : index
    %c0_71 = arith.constant 0 : index
    %76 = vector.load %arg2[%c0_68, %c2_69, %c0_70, %c0_71] : memref<1x4x2x128xf32, #tpu.memory_space<vmem>>, vector<1x1x2x128xf32>
    %77 = vector.shape_cast %76 : vector<1x1x2x128xf32> to vector<2x128xf32>
    %c2_72 = arith.constant 2 : index
    %c2_73 = arith.constant 2 : index
    %78 = memref.load %arg3[%c2_72, %c2_73] : memref<4x4xf32, #tpu.memory_space<smem>>
    %79 = vector.broadcast %78 : f32 to vector<2x128xf32>
    %80 = arith.mulf %77, %79 : vector<2x128xf32>
    %81 = arith.addf %75, %80 : vector<2x128xf32>
    %c0_74 = arith.constant 0 : index
    %c3_75 = arith.constant 3 : index
    %c0_76 = arith.constant 0 : index
    %c0_77 = arith.constant 0 : index
    %82 = vector.load %arg2[%c0_74, %c3_75, %c0_76, %c0_77] : memref<1x4x2x128xf32, #tpu.memory_space<vmem>>, vector<1x1x2x128xf32>
    %83 = vector.shape_cast %82 : vector<1x1x2x128xf32> to vector<2x128xf32>
    %c2_78 = arith.constant 2 : index
    %c3_79 = arith.constant 3 : index
    %84 = memref.load %arg3[%c2_78, %c3_79] : memref<4x4xf32, #tpu.memory_space<smem>>
    %85 = vector.broadcast %84 : f32 to vector<2x128xf32>
    %86 = arith.mulf %83, %85 : vector<2x128xf32>
    %87 = arith.addf %81, %86 : vector<2x128xf32>
    %cst_80 = arith.constant 0.000000e+00 : f32
    %88 = vector.broadcast %cst_80 : f32 to vector<2x128xf32>
    %89 = arith.maximumf %87, %88 : vector<2x128xf32>
    %c0_81 = arith.constant 0 : index
    %c2_82 = arith.constant 2 : index
    %c0_83 = arith.constant 0 : index
    %c0_84 = arith.constant 0 : index
    %90 = vector.load %arg5[%c0_81, %c2_82, %c0_83, %c0_84] : memref<1x4x2x128xf32, #tpu.memory_space<vmem>>, vector<1x1x2x128xf32>
    %91 = vector.shape_cast %90 : vector<1x1x2x128xf32> to vector<2x128xf32>
    %92 = vector.shape_cast %89 : vector<2x128xf32> to vector<1x1x2x128xf32>
    tpu.vector_store %arg5[%c0_81, %c2_82, %c0_83, %c0_84], %92 {strides = array<i32>} : memref<1x4x2x128xf32, #tpu.memory_space<vmem>>, vector<1x1x2x128xf32>,
    %c0_85 = arith.constant 0 : index
    %c0_86 = arith.constant 0 : index
    %c0_87 = arith.constant 0 : index
    %c0_88 = arith.constant 0 : index
    %93 = vector.load %arg2[%c0_85, %c0_86, %c0_87, %c0_88] : memref<1x4x2x128xf32, #tpu.memory_space<vmem>>, vector<1x1x2x128xf32>
    %94 = vector.shape_cast %93 : vector<1x1x2x128xf32> to vector<2x128xf32>
    %c3_89 = arith.constant 3 : index
    %c0_90 = arith.constant 0 : index
    %95 = memref.load %arg3[%c3_89, %c0_90] : memref<4x4xf32, #tpu.memory_space<smem>>
    %96 = vector.broadcast %95 : f32 to vector<2x128xf32>
    %97 = arith.mulf %94, %96 : vector<2x128xf32>
    %c3_91 = arith.constant 3 : index
    %98 = memref.load %arg4[%c3_91] : memref<4xf32, #tpu.memory_space<smem>>
    %99 = vector.broadcast %98 : f32 to vector<2x128xf32>
    %100 = arith.addf %97, %99 : vector<2x128xf32>
    %c0_92 = arith.constant 0 : index
    %c1_93 = arith.constant 1 : index
    %c0_94 = arith.constant 0 : index
    %c0_95 = arith.constant 0 : index
    %101 = vector.load %arg2[%c0_92, %c1_93, %c0_94, %c0_95] : memref<1x4x2x128xf32, #tpu.memory_space<vmem>>, vector<1x1x2x128xf32>
    %102 = vector.shape_cast %101 : vector<1x1x2x128xf32> to vector<2x128xf32>
    %c3_96 = arith.constant 3 : index
    %c1_97 = arith.constant 1 : index
    %103 = memref.load %arg3[%c3_96, %c1_97] : memref<4x4xf32, #tpu.memory_space<smem>>
    %104 = vector.broadcast %103 : f32 to vector<2x128xf32>
    %105 = arith.mulf %102, %104 : vector<2x128xf32>
    %106 = arith.addf %100, %105 : vector<2x128xf32>
    %c0_98 = arith.constant 0 : index
    %c2_99 = arith.constant 2 : index
    %c0_100 = arith.constant 0 : index
    %c0_101 = arith.constant 0 : index
    %107 = vector.load %arg2[%c0_98, %c2_99, %c0_100, %c0_101] : memref<1x4x2x128xf32, #tpu.memory_space<vmem>>, vector<1x1x2x128xf32>
    %108 = vector.shape_cast %107 : vector<1x1x2x128xf32> to vector<2x128xf32>
    %c3_102 = arith.constant 3 : index
    %c2_103 = arith.constant 2 : index
    %109 = memref.load %arg3[%c3_102, %c2_103] : memref<4x4xf32, #tpu.memory_space<smem>>
    %110 = vector.broadcast %109 : f32 to vector<2x128xf32>
    %111 = arith.mulf %108, %110 : vector<2x128xf32>
    %112 = arith.addf %106, %111 : vector<2x128xf32>
    %c0_104 = arith.constant 0 : index
    %c3_105 = arith.constant 3 : index
    %c0_106 = arith.constant 0 : index
    %c0_107 = arith.constant 0 : index
    %113 = vector.load %arg2[%c0_104, %c3_105, %c0_106, %c0_107] : memref<1x4x2x128xf32, #tpu.memory_space<vmem>>, vector<1x1x2x128xf32>
    %114 = vector.shape_cast %113 : vector<1x1x2x128xf32> to vector<2x128xf32>
    %c3_108 = arith.constant 3 : index
    %c3_109 = arith.constant 3 : index
    %115 = memref.load %arg3[%c3_108, %c3_109] : memref<4x4xf32, #tpu.memory_space<smem>>
    %116 = vector.broadcast %115 : f32 to vector<2x128xf32>
    %117 = arith.mulf %114, %116 : vector<2x128xf32>
    %118 = arith.addf %112, %117 : vector<2x128xf32>
    %cst_110 = arith.constant 0.000000e+00 : f32
    %119 = vector.broadcast %cst_110 : f32 to vector<2x128xf32>
    %120 = arith.maximumf %118, %119 : vector<2x128xf32>
    %c0_111 = arith.constant 0 : index
    %c3_112 = arith.constant 3 : index
    %c0_113 = arith.constant 0 : index
    %c0_114 = arith.constant 0 : index
    %121 = vector.load %arg5[%c0_111, %c3_112, %c0_113, %c0_114] : memref<1x4x2x128xf32, #tpu.memory_space<vmem>>, vector<1x1x2x128xf32>
    %122 = vector.shape_cast %121 : vector<1x1x2x128xf32> to vector<2x128xf32>
    %123 = vector.shape_cast %120 : vector<2x128xf32> to vector<1x1x2x128xf32>
    tpu.vector_store %arg5[%c0_111, %c3_112, %c0_113, %c0_114], %123 {strides = array<i32>} : memref<1x4x2x128xf32, #tpu.memory_space<vmem>>, vector<1x1x2x128xf32>,
    return
  }
  func.func @transform_0(%arg0: i32, %arg1: i32) -> (i32, i32, i32, i32) {
    %c0_i32 = arith.constant 0 : i32
    %c0_i32_0 = arith.constant 0 : i32
    %c0_i32_1 = arith.constant 0 : i32
    return %arg0, %c0_i32, %arg1, %c0_i32_0 : i32, i32, i32, i32
  }
  func.func @transform_1(%arg0: i32, %arg1: i32) -> (i32, i32) {
    %c0_i32 = arith.constant 0 : i32
    %c0_i32_0 = arith.constant 0 : i32
    %c0_i32_1 = arith.constant 0 : i32
    return %c0_i32, %c0_i32_0 : i32, i32
  }
  func.func @transform_2(%arg0: i32, %arg1: i32) -> i32 {
    %c0_i32 = arith.constant 0 : i32
    %c0_i32_0 = arith.constant 0 : i32
    return %c0_i32 : i32
  }
  func.func @transform_3(%arg0: i32, %arg1: i32) -> (i32, i32, i32, i32) {
    %c0_i32 = arith.constant 0 : i32
    %c0_i32_0 = arith.constant 0 : i32
    %c0_i32_1 = arith.constant 0 : i32
    return %arg0, %c0_i32, %arg1, %c0_i32_0 : i32, i32, i32, i32
  }
}

</mosaic_0001>

<llo_original>
// kernel: tpu_custom_call.1
$region0: #{tpu_custom_call.1}
  #allocation0 [shape = 'u32[]', space=smem, size = 0x4, offset = 0x4, fixed_abs, tag = 'smem constant byte address 0x4 - core index']
  #allocation1 [shape = 'u32[144,128]{1,0:T(1,128)}', space=vmem, size = 0x12000, scoped, tag = 'internal scratch']
  %s0 = inlined_call_operand.hbm [shape: f32[2,4,2,128], index: 0, kind: input, shape index: {}]
  %s1 = inlined_call_operand.hbm [shape: f32[4,4], index: 1, kind: input, shape index: {}]
  %s2 = inlined_call_operand.vmem [shape: f32[4], index: 2, kind: input, shape index: {}]
  %s3 = inlined_call_operand.hbm [shape: f32[2,4,2,128], index: 3, kind: output, shape index: {}]
  %s4 = sld [smem:[#allocation0]]
  $region57: #{tpu_custom_call.1} parent=0
    _
  %s6 = ssub.s32 1, %s4
  %s7 = scalar_select 0, %s6, %s4
  $region1: #{tpu_custom_call.1} parent=0
    #allocation2 [shape = 'u8[8192]{0}', space=vmem, size = 0x2000, scoped, tag = 'input window, operand 0']
    #allocation3 [shape = 's32[2]{0}', space=sflag, size = 0x8, scoped, tag = 'scoped memory for tpu_custom_call.1']
    #allocation4 [shape = 's32[2]{0}', space=sflag, size = 0x8, scoped, tag = 'scoped memory for tpu_custom_call.1']
    #allocation5 [shape = 's32[2]{0}', space=sflag, size = 0x8, scoped, tag = 'scoped memory for tpu_custom_call.1']
    #allocation6 [shape = 's32[2]{0}', space=sflag, size = 0x8, scoped, tag = 'scoped memory for tpu_custom_call.1']
    #allocation7 [shape = 'u8[2048]{0}', space=smem, size = 0x800, scoped, tag = 'input window, operand 1, single buffered']
    #allocation8 [shape = 'u8[512]{0}', space=smem, size = 0x200, scoped, tag = 'input window, operand 2, single buffered']
    #allocation9 [shape = 'u8[8192]{0}', space=vmem, size = 0x2000, scoped, tag = 'output window, operand 0']
    %8 = vsyncpa [#allocation3], 0
    %s9 = scalar_lea.sflag [#allocation3], 1
    %10 = vsyncpa %s9, 0
    %11 = vsyncpa [#allocation5], 0
    %12 = vsyncpa [#allocation6], 0
    %13 = vsyncpa [#allocation4], 0
    %s14 = scalar_lea.sflag [#allocation4], 1
    %15 = vsyncpa %s14, 0
    loop: start=0, step=1, limit=4
    $region2: #{tpu_custom_call.1} parent=1 // loop_pre_header
      _
    $region3: #{tpu_custom_call.1} parent=1 // loop_header
      %s17 = sphi 0, %s21
      %p18 = scmp.ge.s32.totalorder %s17, 4
      %s24 = sphi 0, %s36
      %s25 = sphi 0, %s32
      %s26 = sphi 0, %s24
      %s27 = sphi 0, %s25
      %s28 = sphi 0, %s26
      %s29 = sphi 0, %s27
      %s41 = sphi 0, %s43
      %s44 = sphi 0, %s41
      %s45 = sphi 0, %s44
      %s61 = sphi 0, %s45
      %s65 = sphi 0, %s65
      %s67 = sphi 0, %s65
      %s68 = sphi 0, %s67
      %s82 = sphi 0, %s68
      %s86 = sphi 0, %s86
      %s88 = sphi 0, %s86
      %s89 = sphi 0, %s88
      %s103 = sphi 0, %s89
      %s111 = sphi 0, %s113
      %s114 = sphi 0, %s111
      %s115 = sphi 0, %s114
      %s131 = sphi 0, %s115
    $region4: #{tpu_custom_call.1} parent=1 // loop_header_branch
      %20 = sbr.rel (%p18) target = $region8
    $region5: #{tpu_custom_call.1} parent=1 // loop_body
      %s22 = ssub.s32 %s17, 1
      %s23 = ssub.s32 %s17, 2
      %s30 = sadd.s32 1, %s25
      %p31 = scmp.ge.s32.totalorder %s30, 1
      %s32 = scalar_select %p31, 0, %s30
      %s33 = sadd.s32 1, %s24
      %s34 = scalar_select %p31, %s33, %s24
      %p35 = scmp.ge.s32.totalorder %s34, 2
      %s36 = scalar_select %p35, 0, %s34
      %s37 = ssub.s32 %s24, %s36
      %s38 = ssub.s32 %s25, %s32
      %s39 = sor.u32 %s37, %s38
      %p40 = scmp.eq.s32.totalorder %s39, 0
      %s42 = sadd.s32 %s41, 1
      %s43 = scalar_select %p40, %s41, %s42
      %p46 = pneg %p40
      %p47 = scmp.eq.s32.totalorder %s17, 1
      %p48 = por %p46, %p47
      %p49 = scmp.ne.s32.totalorder %s41, %s44
      %p50 = scmp.eq.s32.totalorder %s17, 0
      %p51 = por %p49, %p50
      %p52 = scmp.ne.s32.totalorder %s41, %s44
      %p53 = scmp.eq.s32.totalorder %s22, 1
      %p54 = por %p52, %p53
      %p55 = scmp.ne.s32.totalorder %s44, %s45
      %p56 = scmp.eq.s32.totalorder %s22, 0
      %p57 = por %p55, %p56
      %p58 = scmp.ne.s32.totalorder %s44, %s45
      %p59 = scmp.eq.s32.totalorder %s23, 1
      %p60 = por %p58, %p59
      %p62 = scmp.ne.s32.totalorder %s45, %s61
      %p63 = scmp.eq.s32.totalorder %s23, 0
      %p64 = por %p62, %p63
      %s66 = sadd.s32 %s65, 1
      %p69 = scmp.eq.s32.totalorder %s17, 1
      %p70 = scmp.ne.s32.totalorder %s65, %s67
      %p71 = scmp.eq.s32.totalorder %s17, 0
      %p72 = por %p70, %p71
      %p73 = scmp.ne.s32.totalorder %s65, %s67
      %p74 = scmp.eq.s32.totalorder %s22, 1
      %p75 = por %p73, %p74
      %p76 = scmp.ne.s32.totalorder %s67, %s68
      %p77 = scmp.eq.s32.totalorder %s22, 0
      %p78 = por %p76, %p77
      %p79 = scmp.ne.s32.totalorder %s67, %s68
      %p80 = scmp.eq.s32.totalorder %s23, 1
      %p81 = por %p79, %p80
      %p83 = scmp.ne.s32.totalorder %s68, %s82
      %p84 = scmp.eq.s32.totalorder %s23, 0
      %p85 = por %p83, %p84
      %s87 = sadd.s32 %s86, 1
      %p90 = scmp.eq.s32.totalorder %s17, 1
      %p91 = scmp.ne.s32.totalorder %s86, %s88
      %p92 = scmp.eq.s32.totalorder %s17, 0
      %p93 = por %p91, %p92
      %p94 = scmp.ne.s32.totalorder %s86, %s88
      %p95 = scmp.eq.s32.totalorder %s22, 1
      %p96 = por %p94, %p95
      %p97 = scmp.ne.s32.totalorder %s88, %s89
      %p98 = scmp.eq.s32.totalorder %s22, 0
      %p99 = por %p97, %p98
      %p100 = scmp.ne.s32.totalorder %s88, %s89
      %p101 = scmp.eq.s32.totalorder %s23, 1
      %p102 = por %p100, %p101
      %p104 = scmp.ne.s32.totalorder %s89, %s103
      %p105 = scmp.eq.s32.totalorder %s23, 0
      %p106 = por %p104, %p105
      %s107 = ssub.s32 %s24, %s36
      %s108 = ssub.s32 %s25, %s32
      %s109 = sor.u32 %s107, %s108
      %p110 = scmp.eq.s32.totalorder %s109, 0
      %s112 = sadd.s32 %s111, 1
      %s113 = scalar_select %p110, %s111, %s112
      %p116 = pneg %p110
      %p117 = scmp.eq.s32.totalorder %s17, 1
      %p118 = por %p116, %p117
      %p119 = scmp.ne.s32.totalorder %s111, %s114
      %p120 = scmp.eq.s32.totalorder %s17, 0
      %p121 = por %p119, %p120
      %p122 = scmp.ne.s32.totalorder %s111, %s114
      %p123 = scmp.eq.s32.totalorder %s22, 1
      %p124 = por %p122, %p123
      %p125 = scmp.ne.s32.totalorder %s114, %s115
      %p126 = scmp.eq.s32.totalorder %s22, 0
      %p127 = por %p125, %p126
      %p128 = scmp.ne.s32.totalorder %s114, %s115
      %p129 = scmp.eq.s32.totalorder %s23, 1
      %p130 = por %p128, %p129
      %p132 = scmp.ne.s32.totalorder %s115, %s131
      %p133 = scmp.eq.s32.totalorder %s23, 0
      %p134 = por %p132, %p133
      %p135 = scmp.le.s32.totalorder 1, %s17
      %p136 = scmp.lt.s32.totalorder %s17, 3
      %p137 = pnand %p135, %p136
      %p138 = pneg %p137
      // Predicated region
      $region9: #{tpu_custom_call.1} parent=5 // pred_check
        _
      $region10: #{tpu_custom_call.1} parent=5 // pred_check_branch
        %140 = sbr.rel (%p137) target = $region12
      $region11: #{tpu_custom_call.1} parent=5 // pred_region
        %s141 = ssub.s32 %s17, 1
        // Predicated region
        $region13: #{tpu_custom_call.1} parent=11 // pred_check
          %p142 = pneg %p78
        $region14: #{tpu_custom_call.1} parent=11 // pred_check_branch
          %144 = sbr.rel (%p142) target = $region16
        $region15: #{tpu_custom_call.1} parent=11 // pred_region
          %s146 = ssub.s32 64, 64
          %147 = vsyncadd [#allocation5], %s146
          %150 = dma.hbm_to_smem %s1, 64, [#allocation7], [#allocation5]
        $region16: #{tpu_custom_call.1} parent=11 // pred_fallthru
          _
        // Predicated region
        $region17: #{tpu_custom_call.1} parent=11 // pred_check
          %p151 = pneg %p99
        $region18: #{tpu_custom_call.1} parent=11 // pred_check_branch
          %153 = sbr.rel (%p151) target = $region20
        $region19: #{tpu_custom_call.1} parent=11 // pred_region
          %s155 = ssub.s32 16, 16
          %156 = vsyncadd [#allocation6], %s155
          %s158 = sshll.u32 %s2, 4
          %s159 = int_to_ptr.vmem [resolvable:$true] %s158
          %161 = dma.vmem_to_smem %s159, 16, [#allocation8], [#allocation6]
        $region20: #{tpu_custom_call.1} parent=11 // pred_fallthru
          _
      $region12: #{tpu_custom_call.1} parent=5 // pred_fallthru
        _
      %p162 = scmp.lt.s32.totalorder %s17, 2
      // Predicated region
      $region21: #{tpu_custom_call.1} parent=5 // pred_check
        %p163 = pneg %p162
      $region22: #{tpu_custom_call.1} parent=5 // pred_check_branch
        %165 = sbr.rel (%p163) target = $region24
      $region23: #{tpu_custom_call.1} parent=5 // pred_region
        // Predicated region
        $region25: #{tpu_custom_call.1} parent=23 // pred_check
          %p166 = pneg %p51
        $region26: #{tpu_custom_call.1} parent=23 // pred_check_branch
          %168 = sbr.rel (%p166) target = $region28
        $region27: #{tpu_custom_call.1} parent=23 // pred_region
          %s169 = sand.u32 %s41, 1
          %s170 = scalar_lea.sflag [#allocation3], %s169
          %s171 = sand.u32 %s41, 1
          %s172 = smul.addr %s171, 8
          %s173 = scalar_lea.vmem [#allocation2], %s172
          %s175 = ssub.s32 128, 128
          %176 = vsyncadd %s170, %s175
          %s177 = smul.addr %s24, 4
          %s178 = sadd.s32 %s25, %s177
          %s179 = smul.addr %s178, 32
          %s180 = scalar_lea.hbm %s0, %s179
          %s181 = sshll.u32 %s173, 4
          %s182 = int_to_ptr.vmem [resolvable:$true] %s181
          %187 = dma.hbm_to_vmem [thread:$0]  %s180, 128, %s182, %s170, 32, 32, 2
        $region28: #{tpu_custom_call.1} parent=23 // pred_fallthru
          _
      $region24: #{tpu_custom_call.1} parent=5 // pred_fallthru
        _
      %p188 = scmp.le.s32.totalorder 1, %s17
      %p189 = scmp.lt.s32.totalorder %s17, 3
      %p190 = pnand %p188, %p189
      %p191 = pneg %p190
      // Predicated region
      $region29: #{tpu_custom_call.1} parent=5 // pred_check
        _
      $region30: #{tpu_custom_call.1} parent=5 // pred_check_branch
        %193 = sbr.rel (%p190) target = $region32
      $region31: #{tpu_custom_call.1} parent=5 // pred_region
        %s194 = ssub.s32 %s17, 1
        %s195 = sand.u32 %s44, 1
        %s196 = scalar_lea.sflag [#allocation3], %s195
        %s197 = sand.u32 %s44, 1
        %s198 = smul.addr %s197, 8
        %s199 = scalar_lea.vmem [#allocation2], %s198
        // Predicated region
        $region33: #{tpu_custom_call.1} parent=31 // pred_check
          %p200 = pneg %p57
        $region34: #{tpu_custom_call.1} parent=31 // pred_check_branch
          %202 = sbr.rel (%p200) target = $region36
        $region35: #{tpu_custom_call.1} parent=31 // pred_region
          %203 = dma.done %s196, 128
        $region36: #{tpu_custom_call.1} parent=31 // pred_fallthru
          _
        // Predicated region
        $region37: #{tpu_custom_call.1} parent=31 // pred_check
          %p204 = pneg %p78
        $region38: #{tpu_custom_call.1} parent=31 // pred_check_branch
          %206 = sbr.rel (%p204) target = $region40
        $region39: #{tpu_custom_call.1} parent=31 // pred_region
          %207 = dma.done [#allocation5], 64
        $region40: #{tpu_custom_call.1} parent=31 // pred_fallthru
          _
        // Predicated region
        $region41: #{tpu_custom_call.1} parent=31 // pred_check
          %p208 = pneg %p99
        $region42: #{tpu_custom_call.1} parent=31 // pred_check_branch
          %210 = sbr.rel (%p208) target = $region44
        $region43: #{tpu_custom_call.1} parent=31 // pred_region
          %211 = dma.done [#allocation6], 16
        $region44: #{tpu_custom_call.1} parent=31 // pred_fallthru
          _
        %212 = sfence
        %s213 = sand.u32 %s44, 1
        %s214 = scalar_lea.sflag [#allocation3], %s213
        %s215 = sand.u32 %s44, 1
        %s216 = smul.addr %s215, 8
        %s217 = scalar_lea.vmem [#allocation2], %s216
        %p218 = pneg %p57
        %p219 = pneg %p54
        %p220 = pneg %p78
        %p221 = pneg %p75
        %p222 = pneg %p99
        %p223 = pneg %p96
        %p224 = pneg %p127
        %p225 = pneg %p124
        %s226 = sand.u32 %s114, 1
        %s227 = scalar_lea.sflag [#allocation4], %s226
        %s228 = sand.u32 %s114, 1
        %s229 = smul.addr %s228, 8
        %s230 = scalar_lea.vmem [#allocation9], %s229
        %v231 = vld [vmem:[%s199] sm:$0x3]
        %s232 = sld [smem:[#allocation7]]
        %v233 = vstv %s232
        %v234 = vmul.f32 %v231, %v233
        %s235 = sld [smem:[#allocation8]]
        %v236 = vstv %s235
        %v237 = vadd.f32 %v234, %v236
        %s238 = scalar_lea.vmem %s199, 2 [#allocation2]
        %v239 = vld [vmem:[%s238] sm:$0x3]
        %s240 = sld [smem:[#allocation7 + $0x1]]
        %v241 = vstv %s240
        %v242 = vmul.f32 %v239, %v241
        %v243 = vadd.f32 %v237, %v242
        %s244 = scalar_lea.vmem %s199, 4 [#allocation2]
        %v245 = vld [vmem:[%s244] sm:$0x3]
        %s246 = sld [smem:[#allocation7 + $0x2]]
        %v247 = vstv %s246
        %v248 = vmul.f32 %v245, %v247
        %v249 = vadd.f32 %v243, %v248
        %s250 = scalar_lea.vmem %s199, 6 [#allocation2]
        %v251 = vld [vmem:[%s250] sm:$0x3]
        %s252 = sld [smem:[#allocation7 + $0x3]]
        %v253 = vstv %s252
        %v254 = vmul.f32 %v251, %v253
        %v255 = vadd.f32 %v249, %v254
        %v256 = vmax.f32 %v255, 0.0
        %257 = vst [vmem:[%s230] sm:$0x3] %v256
        %v258 = vld [vmem:[%s199] sm:$0x3]
        %s259 = sld [smem:[#allocation7 + $0x80]]
        %v260 = vstv %s259
        %v261 = vmul.f32 %v258, %v260
        %s262 = sld [smem:[#allocation8 + $0x1]]
        %v263 = vstv %s262
        %v264 = vadd.f32 %v261, %v263
        %v265 = vld [vmem:[%s238] sm:$0x3]
        %s266 = sld [smem:[#allocation7 + $0x81]]
        %v267 = vstv %s266
        %v268 = vmul.f32 %v265, %v267
        %v269 = vadd.f32 %v264, %v268
        %v270 = vld [vmem:[%s244] sm:$0x3]
        %s271 = sld [smem:[#allocation7 + $0x82]]
        %v272 = vstv %s271
        %v273 = vmul.f32 %v270, %v272
        %v274 = vadd.f32 %v269, %v273
        %v275 = vld [vmem:[%s250] sm:$0x3]
        %s276 = sld [smem:[#allocation7 + $0x83]]
        %v277 = vstv %s276
        %v278 = vmul.f32 %v275, %v277
        %v279 = vadd.f32 %v274, %v278
        %v280 = vmax.f32 %v279, 0.0
        %s281 = scalar_lea.vmem %s230, 2 [#allocation9]
        %282 = vst [vmem:[%s281] sm:$0x3] %v280
        %v283 = vld [vmem:[%s199] sm:$0x3]
        %s284 = sld [smem:[#allocation7 + $0x100]]
        %v285 = vstv %s284
        %v286 = vmul.f32 %v283, %v285
        %s287 = sld [smem:[#allocation8 + $0x2]]
        %v288 = vstv %s287
        %v289 = vadd.f32 %v286, %v288
        %v290 = vld [vmem:[%s238] sm:$0x3]
        %s291 = sld [smem:[#allocation7 + $0x101]]
        %v292 = vstv %s291
        %v293 = vmul.f32 %v290, %v292
        %v294 = vadd.f32 %v289, %v293
        %v295 = vld [vmem:[%s244] sm:$0x3]
        %s296 = sld [smem:[#allocation7 + $0x102]]
        %v297 = vstv %s296
        %v298 = vmul.f32 %v295, %v297
        %v299 = vadd.f32 %v294, %v298
        %v300 = vld [vmem:[%s250] sm:$0x3]
        %s301 = sld [smem:[#allocation7 + $0x103]]
        %v302 = vstv %s301
        %v303 = vmul.f32 %v300, %v302
        %v304 = vadd.f32 %v299, %v303
        %v305 = vmax.f32 %v304, 0.0
        %s306 = scalar_lea.vmem %s230, 4 [#allocation9]
        %307 = vst [vmem:[%s306] sm:$0x3] %v305
        %v308 = vld [vmem:[%s199] sm:$0x3]
        %s309 = sld [smem:[#allocation7 + $0x180]]
        %v310 = vstv %s309
        %v311 = vmul.f32 %v308, %v310
        %s312 = sld [smem:[#allocation8 + $0x3]]
        %v313 = vstv %s312
        %v314 = vadd.f32 %v311, %v313
        %v315 = vld [vmem:[%s238] sm:$0x3]
        %s316 = sld [smem:[#allocation7 + $0x181]]
        %v317 = vstv %s316
        %v318 = vmul.f32 %v315, %v317
        %v319 = vadd.f32 %v314, %v318
        %v320 = vld [vmem:[%s244] sm:$0x3]
        %s321 = sld [smem:[#allocation7 + $0x182]]
        %v322 = vstv %s321
        %v323 = vmul.f32 %v320, %v322
        %v324 = vadd.f32 %v319, %v323
        %v325 = vld [vmem:[%s250] sm:$0x3]
        %s326 = sld [smem:[#allocation7 + $0x183]]
        %v327 = vstv %s326
        %v328 = vmul.f32 %v325, %v327
        %v329 = vadd.f32 %v324, %v328
        %v330 = vmax.f32 %v329, 0.0
        %s331 = scalar_lea.vmem %s230, 6 [#allocation9]
        %332 = vst [vmem:[%s331] sm:$0x3] %v330
        %s333 = sand.u32 %s114, 1
        %s334 = scalar_lea.sflag [#allocation4], %s333
        %s335 = sand.u32 %s114, 1
        %s336 = smul.addr %s335, 8
        %s337 = scalar_lea.vmem [#allocation9], %s336
        // Predicated region
        $region45: #{tpu_custom_call.1} parent=31 // pred_check
          %p338 = pneg %p124
        $region46: #{tpu_custom_call.1} parent=31 // pred_check_branch
          %340 = sbr.rel (%p338) target = $region48
        $region47: #{tpu_custom_call.1} parent=31 // pred_region
          %s342 = ssub.s32 128, 128
          %343 = vsyncadd %s334, %s342
          %s344 = smul.addr %s26, 4
          %s345 = sadd.s32 %s27, %s344
          %s346 = smul.addr %s345, 32
          %s347 = scalar_lea.hbm %s3, %s346
          %s348 = sshll.u32 %s337, 4
          %s349 = int_to_ptr.vmem [resolvable:$true] %s348
          %354 = dma.vmem_to_hbm [thread:$0]  %s349, 128, %s347, %s334, 32, 32, 2
        $region48: #{tpu_custom_call.1} parent=31 // pred_fallthru
          _
      $region32: #{tpu_custom_call.1} parent=5 // pred_fallthru
        _
      %p355 = scmp.le.s32.totalorder 2, %s17
      // Predicated region
      $region49: #{tpu_custom_call.1} parent=5 // pred_check
        %p356 = pneg %p355
      $region50: #{tpu_custom_call.1} parent=5 // pred_check_branch
        %358 = sbr.rel (%p356) target = $region52
      $region51: #{tpu_custom_call.1} parent=5 // pred_region
        %s359 = ssub.s32 %s17, 2
        // Predicated region
        $region53: #{tpu_custom_call.1} parent=51 // pred_check
          %p360 = pneg %p130
        $region54: #{tpu_custom_call.1} parent=51 // pred_check_branch
          %362 = sbr.rel (%p360) target = $region56
        $region55: #{tpu_custom_call.1} parent=51 // pred_region
          %s363 = sand.u32 %s115, 1
          %s364 = scalar_lea.sflag [#allocation4], %s363
          %s365 = sand.u32 %s115, 1
          %s366 = smul.addr %s365, 8
          %s367 = scalar_lea.vmem [#allocation9], %s366
          %368 = dma.done %s364, 128
        $region56: #{tpu_custom_call.1} parent=51 // pred_fallthru
          _
      $region52: #{tpu_custom_call.1} parent=5 // pred_fallthru
        _
    $region6: #{tpu_custom_call.1} parent=1 // loop_footer
      %s21 = sadd.s32 1, %s17
    $region7: #{tpu_custom_call.1} parent=1 // loop_footer_branch
      %16 = sbr.rel target = $region3
    $region8: #{tpu_custom_call.1} parent=1 // loop_exit
      _
    %369 = vsyncpa [#allocation3], 1
    %s370 = scalar_lea.sflag [#allocation3], 1
    %371 = vsyncpa %s370, 1
    %372 = vsyncpa [#allocation4], 1
    %s373 = scalar_lea.sflag [#allocation4], 1
    %374 = vsyncpa %s373, 1
    %375 = vsyncpa [#allocation5], 1
    %s376 = scalar_lea.sflag [#allocation5], 1
    %377 = vsyncpa %s376, 1
    %378 = vsyncpa [#allocation6], 1
    %s379 = scalar_lea.sflag [#allocation6], 1
    %380 = vsyncpa %s379, 1

</llo_original>
